<compile_context>
chip_gen: v5e
topology: v5e:2x2
jax: 0.10.0
libtpu: 0.0.40
codegen_flags: <defaults>
</compile_context>

<pallas_src>
import functools

import jax
import jax.numpy as jnp
from jax.experimental import pallas as pl
from jax.experimental.pallas import tpu as pltpu


def _cnn_block_kernel(x_ref, halo_ref, wf_ref, bf_ref, g_ref, beta_ref, o_ref,
                      *, c_true, eps, fuse_taps):
    # x_ref:    (tl, C)   current sequence tile (unpadded x, auto-pipelined)
    # halo_ref: (2, C)    row 0 = x[start-1] (zeros at seq start),
    #                     row 1 = x[end]     (zeros at seq end)
    # wf_ref:   (3C, Cp) if fuse_taps else (3, C, Cp)  -- fused conv1@conv2
    # bf_ref, g_ref, beta_ref: (1, Cp) (zero-padded beyond the true C)
    # o_ref:    (tl, Cp)  lane-dense output tile
    f32 = jnp.float32
    tl, c = x_ref.shape
    cp = o_ref.shape[-1]

    x_cur = x_ref[...]
    left = halo_ref[0:1, :]
    right = halo_ref[1:2, :]
    # Shifted views for the k=3 taps (one sublane shift + one halo row each).
    x_prev = jnp.concatenate([left, x_cur[:-1, :]], axis=0)
    x_next = jnp.concatenate([x_cur[1:, :], right], axis=0)

    if fuse_taps:
        # Small C: pack the three taps into ONE MXU dot with K = 3C.
        xcat = jnp.concatenate([x_prev, x_cur, x_next], axis=-1)    # (tl, 3C)
        h = jnp.dot(xcat, wf_ref[...], preferred_element_type=f32)
    else:
        # C >= 128: three accumulated K=C dots, no lane-dim concat temp.
        h = jnp.dot(x_prev, wf_ref[0], preferred_element_type=f32)
        h = h + jnp.dot(x_cur, wf_ref[1], preferred_element_type=f32)
        h = h + jnp.dot(x_next, wf_ref[2], preferred_element_type=f32)
    h = h + bf_ref[...]                                             # (tl, Cp)

    # Residual + ReLU. When Cp > C the residual's padded lanes are zero, so
    # `res` is exactly zero there (fused weight/bias columns are also zero).
    res_x = x_cur.astype(f32)
    if cp != c:
        res_x = jnp.concatenate(
            [res_x, jnp.zeros((tl, cp - c), f32)], axis=-1)
    res = res_x + jnp.maximum(h, 0.0)

    # Masked LayerNorm over the true channels: padded lanes contribute 0 to
    # both sums, so we just divide by the true channel count. Single pass
    # (sum and sum-of-squares), variance clamped at 0 against cancellation.
    inv_c = 1.0 / c_true
    s1 = jnp.sum(res, axis=-1, keepdims=True)
    s2 = jnp.sum(res * res, axis=-1, keepdims=True)
    mean = s1 * inv_c
    var = jnp.maximum(s2 * inv_c - mean * mean, 0.0)
    norm = (res - mean) * jax.lax.rsqrt(var + eps)
    # gamma/beta are zero-padded -> padded output lanes store exact zeros.
    o_ref[...] = (norm * g_ref[...] + beta_ref[...]).astype(o_ref.dtype)


def _ceil_div(a, b):
    return -(-a // b)


def _round_up(a, b):
    return _ceil_div(a, b) * b


def _choose_seq_tile(L, cp, target_bytes=2 << 20):
    """Pick (tl, Lp): tl is a multiple of 8; Lp is L padded to nt*tl rows."""
    # Size the output tile toward ~1-2 MB, then prefer an exact multiple-of-8
    # divisor of L (no sequence padding); otherwise round up and pad L.
    target_rows = max(64, min(1024, target_bytes // max(1, 4 * cp)))
    target_rows = max(8, (target_rows // 8) * 8)
    best = 0
    d = 8
    while d <= min(L, target_rows):
        if L % d == 0:
            best = d
        d += 8
    if best >= min(128, L):
        return best, L
    nt = max(1, _ceil_div(L, target_rows))
    tl = _round_up(_ceil_div(L, nt), 8)
    return tl, nt * tl


def cnn_block_pallas(x, w1, b1, w2, b2, gamma, beta, *, eps=1e-5, tl=None,
                     pad_channels=None, vmem_limit_bytes=None, interpret=False):
    """Fused CNN_block forward.

    Args (channels-last; the transposes in the PyTorch forward are layout-only):
      x:     (B, L, C)
      w1:    (3, C, C) conv1 weight as [tap, in, out]
             (torch: conv1.weight.permute(2, 1, 0); tap 0 multiplies x[l-1]).
      b1:    (1, C)    conv1 bias.
      w2:    (C, C)    conv2 (k=1) weight as [in, out] (conv2.weight[:, :, 0].T).
      b2:    (1, C)    conv2 bias.
      gamma, beta: (1, C) LayerNorm affine parameters.
    """
    B, L, C = x.shape
    f32 = jnp.float32

    # --- channel (lane) padding: lane-dense stores for C < 128 ------------
    if pad_channels is None:
        pad_channels = C < 128
    Cp = 128 if (pad_channels and C < 128) else C

    # --- sequence tiling ---------------------------------------------------
    if tl is None:
        tl, Lp = _choose_seq_tile(L, Cp)
    else:
        if tl % 8 != 0 and tl != L:
            raise ValueError("tl must be a multiple of 8 (TPU sublane)")
        Lp = _round_up(L, tl)
    nt = Lp // tl

    # --- host-side algebraic fusion of conv1 (k=3) and conv2 (k=1) --------
    #   (x * w1 + b1) * w2 + b2  (no nonlinearity in between)
    #   => w_fused[t] = w1[t] @ w2 ; b_fused = b1 @ w2 + b2
    wf = jnp.einsum("tio,od->tid", w1.astype(f32), w2.astype(f32))  # (3, C, C)
    bf = b1.astype(f32) @ w2.astype(f32) + b2.astype(f32)           # (1, C)
    g = gamma.astype(f32)
    bt = beta.astype(f32)
    if Cp != C:
        padc = ((0, 0), (0, Cp - C))
        wf = jnp.pad(wf, ((0, 0), (0, 0), (0, Cp - C)))
        bf = jnp.pad(bf, padc)
        g = jnp.pad(g, padc)
        bt = jnp.pad(bt, padc)

    fuse_taps = C < 128        # one K=3C dot for small C, else 3 K=C dots
    wf = wf.astype(x.dtype)
    if fuse_taps:
        wf = wf.reshape(3 * C, Cp)
        w_spec = pl.BlockSpec((3 * C, Cp), lambda b, t: (0, 0))
    else:
        w_spec = pl.BlockSpec((3, C, Cp), lambda b, t: (0, 0, 0))

    # --- pad L only when it is not a whole number of tiles -----------------
    xL = x if Lp == L else jnp.pad(x, ((0, 0), (0, Lp - L), (0, 0)))

    # --- conv halo rows: 2 rows per (batch, tile), gathered on the host ----
    # left[b, t]  = x[b, t*tl - 1]   (zeros for the first tile)
    # right[b, t] = x[b, (t+1)*tl]   (zeros for the last tile)
    xr = xL.reshape(B, nt, tl, C)
    zrow = jnp.zeros((B, 1, C), xL.dtype)
    left = jnp.concatenate([zrow, xr[:, :-1, -1, :]], axis=1)   # (B, nt, C)
    right = jnp.concatenate([xr[:, 1:, 0, :], zrow], axis=1)    # (B, nt, C)
    halo = jnp.stack([left, right], axis=2)                     # (B, nt, 2, C)

    kernel = functools.partial(_cnn_block_kernel, c_true=C, eps=eps,
                               fuse_taps=fuse_taps)
    out = pl.pallas_call(
        kernel,
        out_shape=jax.ShapeDtypeStruct((B, Lp, Cp), x.dtype),
        grid_spec=pltpu.PrefetchScalarGridSpec(
            num_scalar_prefetch=0,
            grid=(B, nt),
            in_specs=[
                # current sequence tile (no pad, no resident slab)
                pl.BlockSpec((None, tl, C), lambda b, t: (b, t, 0)),
                # 2 halo rows for this tile
                pl.BlockSpec((None, None, 2, C), lambda b, t: (b, t, 0, 0)),
                w_spec,                                          # fused weight
                pl.BlockSpec((1, Cp), lambda b, t: (0, 0)),      # fused bias
                pl.BlockSpec((1, Cp), lambda b, t: (0, 0)),      # ln gamma
                pl.BlockSpec((1, Cp), lambda b, t: (0, 0)),      # ln beta
            ],
            out_specs=pl.BlockSpec((None, tl, Cp), lambda b, t: (b, t, 0)),
        ),
        compiler_params=pltpu.CompilerParams(
            # Every (b, t) tile is independent (halo comes as data), so both
            # axes can be sharded across cores on v7x without duplicating x.
            dimension_semantics=("parallel", "parallel"),
            vmem_limit_bytes=vmem_limit_bytes,
        ),
        interpret=interpret,
    )(xL, halo, wf, bf, g, bt)

    if Lp != L or Cp != C:
        out = out[:, :L, :C]
    return out


def cnn_block_reference(x, w1, b1, w2, b2, gamma, beta, eps=1e-5):
    """Pure-JAX reference matching the PyTorch forward (channels-last)."""
    x = x.astype(jnp.float32)
    x_prev = jnp.pad(x, ((0, 0), (1, 0), (0, 0)))[:, :-1, :]
    x_next = jnp.pad(x, ((0, 0), (0, 1), (0, 0)))[:, 1:, :]
    h1 = (jnp.einsum("blc,cd->bld", x_prev, w1[0])
          + jnp.einsum("blc,cd->bld", x, w1[1])
          + jnp.einsum("blc,cd->bld", x_next, w1[2]) + b1)
    h2 = jnp.einsum("blc,cd->bld", h1, w2) + b2
    res = x + jnp.maximum(h2, 0.0)
    mean = jnp.mean(res, axis=-1, keepdims=True)
    var = jnp.mean(jnp.square(res - mean), axis=-1, keepdims=True)
    return (res - mean) * jax.lax.rsqrt(var + eps) * gamma + beta


if __name__ == "__main__":
    B, L, C = 2, 16, 32          # batch, seq, input_size == hidden_size
    key = jax.random.PRNGKey(0)
    kx, kw1, kb1, kw2, kb2 = jax.random.split(key, 5)

    x = jax.random.normal(kx, (B, L, C), jnp.float32)

    # Synthetic parameters (same shapes as the nn.Module params; conv weights
    # stored pre-transposed as [tap, in_channels, out_channels]).
    fan1 = C * 3
    w1 = jax.random.uniform(kw1, (3, C, C), jnp.float32,
                            -1.0 / jnp.sqrt(fan1), 1.0 / jnp.sqrt(fan1))
    b1 = jax.random.uniform(kb1, (1, C), jnp.float32,
                            -1.0 / jnp.sqrt(fan1), 1.0 / jnp.sqrt(fan1))
    fan2 = C
    w2 = jax.random.uniform(kw2, (C, C), jnp.float32,
                            -1.0 / jnp.sqrt(fan2), 1.0 / jnp.sqrt(fan2))
    b2 = jax.random.uniform(kb2, (1, C), jnp.float32,
                            -1.0 / jnp.sqrt(fan2), 1.0 / jnp.sqrt(fan2))
    gamma = jnp.ones((1, C), jnp.float32)     # LayerNorm weight init
    beta = jnp.zeros((1, C), jnp.float32)     # LayerNorm bias init

    # tl=8 exercises the multi-tile halo path and the padded-C masked LN
    # (grid = (2, 2), Cp = 128).
    out = cnn_block_pallas(x, w1, b1, w2, b2, gamma, beta, tl=8)
    out = jax.block_until_ready(out)

    ref = cnn_block_reference(x, w1, b1, w2, b2, gamma, beta)
    assert out.shape == (B, L, C)
    assert jnp.allclose(out, ref, atol=1e-4, rtol=1e-4), "mismatch vs reference"

    print("KERNEL_OK")
</pallas_src>

<mosaic_0001>
module attributes {stable_mosaic.version = 11 : i64} {
  func.func @_cnn_block_kernel(%arg0: i32, %arg1: i32, %arg2: memref<1x8x32xf32, #tpu.memory_space<vmem>>, %arg3: memref<1x1x2x32xf32, #tpu.memory_space<vmem>>, %arg4: memref<96x128xf32, #tpu.memory_space<vmem>>, %arg5: memref<1x128xf32, #tpu.memory_space<vmem>>, %arg6: memref<1x128xf32, #tpu.memory_space<vmem>>, %arg7: memref<1x128xf32, #tpu.memory_space<vmem>>, %arg8: memref<1x8x128xf32, #tpu.memory_space<vmem>>) attributes {dimension_semantics = [#tpu.dimension_semantics<parallel>, #tpu.dimension_semantics<parallel>], iteration_bounds = array<i64: 2, 2>, scalar_prefetch = 0 : i64, scratch_operands = 0 : i64, tpu.core_type = #tpu.core_type<tc>, window_params = [{transform_indices = @transform_0, window_bounds = array<i64: 1, 8, 32>}, {transform_indices = @transform_1, window_bounds = array<i64: 1, 1, 2, 32>}, {pipeline_mode = #tpu.pipeline_mode<synchronous>, transform_indices = @transform_2, window_bounds = array<i64: 96, 128>}, {pipeline_mode = #tpu.pipeline_mode<synchronous>, transform_indices = @transform_3, window_bounds = array<i64: 1, 128>}, {pipeline_mode = #tpu.pipeline_mode<synchronous>, transform_indices = @transform_4, window_bounds = array<i64: 1, 128>}, {pipeline_mode = #tpu.pipeline_mode<synchronous>, transform_indices = @transform_5, window_bounds = array<i64: 1, 128>}, {transform_indices = @transform_6, window_bounds = array<i64: 1, 8, 128>}]} {
    %c0 = arith.constant 0 : index
    %c0_0 = arith.constant 0 : index
    %c0_1 = arith.constant 0 : index
    %0 = vector.load %arg2[%c0, %c0_0, %c0_1] : memref<1x8x32xf32, #tpu.memory_space<vmem>>, vector<1x8x32xf32>
    %1 = vector.shape_cast %0 : vector<1x8x32xf32> to vector<8x32xf32>
    %c0_2 = arith.constant 0 : index
    %c0_3 = arith.constant 0 : index
    %c0_4 = arith.constant 0 : index
    %c0_5 = arith.constant 0 : index
    %2 = vector.load %arg3[%c0_2, %c0_3, %c0_4, %c0_5] : memref<1x1x2x32xf32, #tpu.memory_space<vmem>>, vector<1x1x1x32xf32>
    %3 = vector.shape_cast %2 : vector<1x1x1x32xf32> to vector<1x32xf32>
    %c0_6 = arith.constant 0 : index
    %c0_7 = arith.constant 0 : index
    %c1 = arith.constant 1 : index
    %c0_8 = arith.constant 0 : index
    %4 = vector.load %arg3[%c0_6, %c0_7, %c1, %c0_8] : memref<1x1x2x32xf32, #tpu.memory_space<vmem>>, vector<1x1x1x32xf32>
    %5 = vector.shape_cast %4 : vector<1x1x1x32xf32> to vector<1x32xf32>
    %6 = vector.extract_strided_slice %1 {offsets = [0, 0], sizes = [7, 32], strides = [1, 1]} : vector<8x32xf32> to vector<7x32xf32>
    %7 = tpu.concatenate %3, %6 in 0 : vector<1x32xf32>, vector<7x32xf32> -> vector<8x32xf32>
    %8 = vector.extract_strided_slice %1 {offsets = [1, 0], sizes = [7, 32], strides = [1, 1]} : vector<8x32xf32> to vector<7x32xf32>
    %9 = tpu.concatenate %8, %5 in 0 : vector<7x32xf32>, vector<1x32xf32> -> vector<8x32xf32>
    %10 = tpu.concatenate %7, %1, %9 in 1 : vector<8x32xf32>, vector<8x32xf32>, vector<8x32xf32> -> vector<8x96xf32>
    %c0_9 = arith.constant 0 : index
    %c0_10 = arith.constant 0 : index
    %11 = vector.load %arg4[%c0_9, %c0_10] : memref<96x128xf32, #tpu.memory_space<vmem>>, vector<96x128xf32>
    %cst = arith.constant dense<0.000000e+00> : vector<8x128xf32>
    %12 = tpu.matmul %10, %11, %cst {dimension_numbers = #tpu.dot_dimension_numbers<[1], [0], [0], [1], [0, 0, 1, 1], [], []>} : vector<8x96xf32>, vector<96x128xf32>, vector<8x128xf32> -> vector<8x128xf32>
    %c0_11 = arith.constant 0 : index
    %c0_12 = arith.constant 0 : index
    %13 = vector.load %arg5[%c0_11, %c0_12] : memref<1x128xf32, #tpu.memory_space<vmem>>, vector<1x128xf32>
    %14 = vector.broadcast %13 : vector<1x128xf32> to vector<8x128xf32>
    %15 = arith.addf %12, %14 : vector<8x128xf32>
    %cst_13 = arith.constant 0.000000e+00 : f32
    %16 = vector.broadcast %cst_13 : f32 to vector<8x96xf32>
    %17 = tpu.concatenate %1, %16 in 1 : vector<8x32xf32>, vector<8x96xf32> -> vector<8x128xf32>
    %cst_14 = arith.constant 0.000000e+00 : f32
    %18 = vector.broadcast %cst_14 : f32 to vector<8x128xf32>
    %19 = arith.maximumf %15, %18 : vector<8x128xf32>
    %20 = arith.addf %17, %19 : vector<8x128xf32>
    %cst_15 = arith.constant dense<0.000000e+00> : vector<8xf32>
    %21 = vector.multi_reduction <add>, %20, %cst_15 [1] : vector<8x128xf32> to vector<8xf32>
    %22 = vector.shape_cast %21 : vector<8xf32> to vector<8x1xf32>
    %23 = arith.mulf %20, %20 : vector<8x128xf32>
    %cst_16 = arith.constant dense<0.000000e+00> : vector<8xf32>
    %24 = vector.multi_reduction <add>, %23, %cst_16 [1] : vector<8x128xf32> to vector<8xf32>
    %25 = vector.shape_cast %24 : vector<8xf32> to vector<8x1xf32>
    %cst_17 = arith.constant 3.125000e-02 : f32
    %26 = vector.broadcast %cst_17 : f32 to vector<8x1xf32>
    %27 = arith.mulf %22, %26 : vector<8x1xf32>
    %cst_18 = arith.constant 3.125000e-02 : f32
    %28 = vector.broadcast %cst_18 : f32 to vector<8x1xf32>
    %29 = arith.mulf %25, %28 : vector<8x1xf32>
    %30 = arith.mulf %27, %27 : vector<8x1xf32>
    %31 = arith.subf %29, %30 : vector<8x1xf32>
    %cst_19 = arith.constant 0.000000e+00 : f32
    %32 = vector.broadcast %cst_19 : f32 to vector<8x1xf32>
    %33 = arith.maximumf %31, %32 : vector<8x1xf32>
    %34 = vector.broadcast %27 : vector<8x1xf32> to vector<8x128xf32>
    %35 = arith.subf %20, %34 : vector<8x128xf32>
    %cst_20 = arith.constant 9.99999974E-6 : f32
    %36 = vector.broadcast %cst_20 : f32 to vector<8x1xf32>
    %37 = arith.addf %33, %36 : vector<8x1xf32>
    %38 = math.rsqrt %37 : vector<8x1xf32>
    %39 = vector.broadcast %38 : vector<8x1xf32> to vector<8x128xf32>
    %40 = arith.mulf %35, %39 : vector<8x128xf32>
    %c0_21 = arith.constant 0 : index
    %c0_22 = arith.constant 0 : index
    %41 = vector.load %arg6[%c0_21, %c0_22] : memref<1x128xf32, #tpu.memory_space<vmem>>, vector<1x128xf32>
    %42 = vector.broadcast %41 : vector<1x128xf32> to vector<8x128xf32>
    %43 = arith.mulf %40, %42 : vector<8x128xf32>
    %c0_23 = arith.constant 0 : index
    %c0_24 = arith.constant 0 : index
    %44 = vector.load %arg7[%c0_23, %c0_24] : memref<1x128xf32, #tpu.memory_space<vmem>>, vector<1x128xf32>
    %45 = vector.broadcast %44 : vector<1x128xf32> to vector<8x128xf32>
    %46 = arith.addf %43, %45 : vector<8x128xf32>
    %c0_25 = arith.constant 0 : index
    %c0_26 = arith.constant 0 : index
    %c0_27 = arith.constant 0 : index
    %47 = vector.load %arg8[%c0_25, %c0_26, %c0_27] : memref<1x8x128xf32, #tpu.memory_space<vmem>>, vector<1x8x128xf32>
    %48 = vector.shape_cast %47 : vector<1x8x128xf32> to vector<8x128xf32>
    %49 = vector.shape_cast %46 : vector<8x128xf32> to vector<1x8x128xf32>
    tpu.vector_store %arg8[%c0_25, %c0_26, %c0_27], %49 {strides = array<i32>} : memref<1x8x128xf32, #tpu.memory_space<vmem>>, vector<1x8x128xf32>,
    return
  }
  func.func @transform_0(%arg0: i32, %arg1: i32) -> (i32, i32, i32) {
    %c0_i32 = arith.constant 0 : i32
    %c0_i32_0 = arith.constant 0 : i32
    return %arg0, %arg1, %c0_i32 : i32, i32, i32
  }
  func.func @transform_1(%arg0: i32, %arg1: i32) -> (i32, i32, i32, i32) {
    %c0_i32 = arith.constant 0 : i32
    %c0_i32_0 = arith.constant 0 : i32
    %c0_i32_1 = arith.constant 0 : i32
    return %arg0, %arg1, %c0_i32, %c0_i32_0 : i32, i32, i32, i32
  }
  func.func @transform_2(%arg0: i32, %arg1: i32) -> (i32, i32) {
    %c0_i32 = arith.constant 0 : i32
    %c0_i32_0 = arith.constant 0 : i32
    %c0_i32_1 = arith.constant 0 : i32
    return %c0_i32, %c0_i32_0 : i32, i32
  }
  func.func @transform_3(%arg0: i32, %arg1: i32) -> (i32, i32) {
    %c0_i32 = arith.constant 0 : i32
    %c0_i32_0 = arith.constant 0 : i32
    %c0_i32_1 = arith.constant 0 : i32
    return %c0_i32, %c0_i32_0 : i32, i32
  }
  func.func @transform_4(%arg0: i32, %arg1: i32) -> (i32, i32) {
    %c0_i32 = arith.constant 0 : i32
    %c0_i32_0 = arith.constant 0 : i32
    %c0_i32_1 = arith.constant 0 : i32
    return %c0_i32, %c0_i32_0 : i32, i32
  }
  func.func @transform_5(%arg0: i32, %arg1: i32) -> (i32, i32) {
    %c0_i32 = arith.constant 0 : i32
    %c0_i32_0 = arith.constant 0 : i32
    %c0_i32_1 = arith.constant 0 : i32
    return %c0_i32, %c0_i32_0 : i32, i32
  }
  func.func @transform_6(%arg0: i32, %arg1: i32) -> (i32, i32, i32) {
    %c0_i32 = arith.constant 0 : i32
    %c0_i32_0 = arith.constant 0 : i32
    return %arg0, %arg1, %c0_i32 : i32, i32, i32
  }
}

</mosaic_0001>

<llo_original>
// kernel: tpu_custom_call.1
$region0: #{tpu_custom_call.1}
  #allocation0 [shape = 'u32[]', space=smem, size = 0x4, offset = 0x4, fixed_abs, tag = 'smem constant byte address 0x4 - core index']
  #allocation1 [shape = 'u32[72,128]{1,0:T(1,128)}', space=vmem, size = 0x9000, scoped, tag = 'internal scratch']
  %s0 = inlined_call_operand.hbm [shape: f32[2,16,32], index: 0, kind: input, shape index: {}]
  %s1 = inlined_call_operand.hbm [shape: f32[2,2,2,32], index: 1, kind: input, shape index: {}]
  %s2 = inlined_call_operand.hbm [shape: f32[96,128], index: 2, kind: input, shape index: {}]
  %s3 = inlined_call_operand.vmem [shape: f32[1,128], index: 3, kind: input, shape index: {}]
  %s4 = inlined_call_operand.vmem [shape: f32[1,128], index: 4, kind: input, shape index: {}]
  %s5 = inlined_call_operand.vmem [shape: f32[1,128], index: 5, kind: input, shape index: {}]
  %s6 = inlined_call_operand.hbm [shape: f32[2,16,128], index: 6, kind: output, shape index: {}]
  %s7 = sld [smem:[#allocation0]]
  $region69: #{tpu_custom_call.1} parent=0
    _
  %s9 = ssub.s32 1, %s7
  %s10 = scalar_select 0, %s9, %s7
  $region1: #{tpu_custom_call.1} parent=0
    #allocation2 [shape = 'u8[8192]{0}', space=vmem, size = 0x2000, scoped, tag = 'input window, operand 0']
    #allocation3 [shape = 's32[2]{0}', space=sflag, size = 0x8, scoped, tag = 'scoped memory for tpu_custom_call.1']
    #allocation4 [shape = 's32[2]{0}', space=sflag, size = 0x8, scoped, tag = 'scoped memory for tpu_custom_call.1']
    #allocation5 [shape = 'u8[2048]{0}', space=vmem, size = 0x800, scoped, tag = 'input window, operand 1']
    #allocation6 [shape = 's32[2]{0}', space=sflag, size = 0x8, scoped, tag = 'scoped memory for tpu_custom_call.1']
    #allocation7 [shape = 'u8[49152]{0}', space=vmem, size = 0xc000, scoped, tag = 'input window, operand 2, single buffered']
    #allocation8 [shape = 'u8[8192]{0}', space=vmem, size = 0x2000, scoped, tag = 'output window, operand 0']
    %11 = vsyncpa [#allocation3], 0
    %s12 = scalar_lea.sflag [#allocation3], 1
    %13 = vsyncpa %s12, 0
    %14 = vsyncpa [#allocation6], 0
    %s15 = scalar_lea.sflag [#allocation6], 1
    %16 = vsyncpa %s15, 0
    %17 = vsyncpa [#allocation4], 0
    %s18 = scalar_lea.sflag [#allocation4], 1
    %19 = vsyncpa %s18, 0
    loop: start=0, step=1, limit=6
    $region2: #{tpu_custom_call.1} parent=1 // loop_pre_header
      _
    $region3: #{tpu_custom_call.1} parent=1 // loop_header
      %s21 = sphi 0, %s25
      %p22 = scmp.ge.s32.totalorder %s21, 6
      %s28 = sphi 0, %s40
      %s29 = sphi 0, %s36
      %s30 = sphi 0, %s28
      %s31 = sphi 0, %s29
      %s32 = sphi 0, %s30
      %s33 = sphi 0, %s31
      %s45 = sphi 0, %s47
      %s48 = sphi 0, %s45
      %s49 = sphi 0, %s48
      %s65 = sphi 0, %s49
      %s73 = sphi 0, %s75
      %s76 = sphi 0, %s73
      %s77 = sphi 0, %s76
      %s93 = sphi 0, %s77
      %s97 = sphi 0, %s97
      %s99 = sphi 0, %s97
      %s100 = sphi 0, %s99
      %s114 = sphi 0, %s100
      %s118 = sphi 0, %s118
      %s120 = sphi 0, %s118
      %s121 = sphi 0, %s120
      %s135 = sphi 0, %s121
      %s139 = sphi 0, %s139
      %s141 = sphi 0, %s139
      %s142 = sphi 0, %s141
      %s156 = sphi 0, %s142
      %s160 = sphi 0, %s160
      %s162 = sphi 0, %s160
      %s163 = sphi 0, %s162
      %s177 = sphi 0, %s163
      %s185 = sphi 0, %s187
      %s188 = sphi 0, %s185
      %s189 = sphi 0, %s188
      %s205 = sphi 0, %s189
    $region4: #{tpu_custom_call.1} parent=1 // loop_header_branch
      %24 = sbr.rel (%p22) target = $region8
    $region5: #{tpu_custom_call.1} parent=1 // loop_body
      %s26 = ssub.s32 %s21, 1
      %s27 = ssub.s32 %s21, 2
      %s34 = sadd.s32 1, %s29
      %p35 = scmp.ge.s32.totalorder %s34, 2
      %s36 = scalar_select %p35, 0, %s34
      %s37 = sadd.s32 1, %s28
      %s38 = scalar_select %p35, %s37, %s28
      %p39 = scmp.ge.s32.totalorder %s38, 2
      %s40 = scalar_select %p39, 0, %s38
      %s41 = ssub.s32 %s28, %s40
      %s42 = ssub.s32 %s29, %s36
      %s43 = sor.u32 %s41, %s42
      %p44 = scmp.eq.s32.totalorder %s43, 0
      %s46 = sadd.s32 %s45, 1
      %s47 = scalar_select %p44, %s45, %s46
      %p50 = pneg %p44
      %p51 = scmp.eq.s32.totalorder %s21, 3
      %p52 = por %p50, %p51
      %p53 = scmp.ne.s32.totalorder %s45, %s48
      %p54 = scmp.eq.s32.totalorder %s21, 0
      %p55 = por %p53, %p54
      %p56 = scmp.ne.s32.totalorder %s45, %s48
      %p57 = scmp.eq.s32.totalorder %s26, 3
      %p58 = por %p56, %p57
      %p59 = scmp.ne.s32.totalorder %s48, %s49
      %p60 = scmp.eq.s32.totalorder %s26, 0
      %p61 = por %p59, %p60
      %p62 = scmp.ne.s32.totalorder %s48, %s49
      %p63 = scmp.eq.s32.totalorder %s27, 3
      %p64 = por %p62, %p63
      %p66 = scmp.ne.s32.totalorder %s49, %s65
      %p67 = scmp.eq.s32.totalorder %s27, 0
      %p68 = por %p66, %p67
      %s69 = ssub.s32 %s28, %s40
      %s70 = ssub.s32 %s29, %s36
      %s71 = sor.u32 %s69, %s70
      %p72 = scmp.eq.s32.totalorder %s71, 0
      %s74 = sadd.s32 %s73, 1
      %s75 = scalar_select %p72, %s73, %s74
      %p78 = pneg %p72
      %p79 = scmp.eq.s32.totalorder %s21, 3
      %p80 = por %p78, %p79
      %p81 = scmp.ne.s32.totalorder %s73, %s76
      %p82 = scmp.eq.s32.totalorder %s21, 0
      %p83 = por %p81, %p82
      %p84 = scmp.ne.s32.totalorder %s73, %s76
      %p85 = scmp.eq.s32.totalorder %s26, 3
      %p86 = por %p84, %p85
      %p87 = scmp.ne.s32.totalorder %s76, %s77
      %p88 = scmp.eq.s32.totalorder %s26, 0
      %p89 = por %p87, %p88
      %p90 = scmp.ne.s32.totalorder %s76, %s77
      %p91 = scmp.eq.s32.totalorder %s27, 3
      %p92 = por %p90, %p91
      %p94 = scmp.ne.s32.totalorder %s77, %s93
      %p95 = scmp.eq.s32.totalorder %s27, 0
      %p96 = por %p94, %p95
      %s98 = sadd.s32 %s97, 1
      %p101 = scmp.eq.s32.totalorder %s21, 3
      %p102 = scmp.ne.s32.totalorder %s97, %s99
      %p103 = scmp.eq.s32.totalorder %s21, 0
      %p104 = por %p102, %p103
      %p105 = scmp.ne.s32.totalorder %s97, %s99
      %p106 = scmp.eq.s32.totalorder %s26, 3
      %p107 = por %p105, %p106
      %p108 = scmp.ne.s32.totalorder %s99, %s100
      %p109 = scmp.eq.s32.totalorder %s26, 0
      %p110 = por %p108, %p109
      %p111 = scmp.ne.s32.totalorder %s99, %s100
      %p112 = scmp.eq.s32.totalorder %s27, 3
      %p113 = por %p111, %p112
      %p115 = scmp.ne.s32.totalorder %s100, %s114
      %p116 = scmp.eq.s32.totalorder %s27, 0
      %p117 = por %p115, %p116
      %s119 = sadd.s32 %s118, 1
      %p122 = scmp.eq.s32.totalorder %s21, 3
      %p123 = scmp.ne.s32.totalorder %s118, %s120
      %p124 = scmp.eq.s32.totalorder %s21, 0
      %p125 = por %p123, %p124
      %p126 = scmp.ne.s32.totalorder %s118, %s120
      %p127 = scmp.eq.s32.totalorder %s26, 3
      %p128 = por %p126, %p127
      %p129 = scmp.ne.s32.totalorder %s120, %s121
      %p130 = scmp.eq.s32.totalorder %s26, 0
      %p131 = por %p129, %p130
      %p132 = scmp.ne.s32.totalorder %s120, %s121
      %p133 = scmp.eq.s32.totalorder %s27, 3
      %p134 = por %p132, %p133
      %p136 = scmp.ne.s32.totalorder %s121, %s135
      %p137 = scmp.eq.s32.totalorder %s27, 0
      %p138 = por %p136, %p137
      %s140 = sadd.s32 %s139, 1
      %p143 = scmp.eq.s32.totalorder %s21, 3
      %p144 = scmp.ne.s32.totalorder %s139, %s141
      %p145 = scmp.eq.s32.totalorder %s21, 0
      %p146 = por %p144, %p145
      %p147 = scmp.ne.s32.totalorder %s139, %s141
      %p148 = scmp.eq.s32.totalorder %s26, 3
      %p149 = por %p147, %p148
      %p150 = scmp.ne.s32.totalorder %s141, %s142
      %p151 = scmp.eq.s32.totalorder %s26, 0
      %p152 = por %p150, %p151
      %p153 = scmp.ne.s32.totalorder %s141, %s142
      %p154 = scmp.eq.s32.totalorder %s27, 3
      %p155 = por %p153, %p154
      %p157 = scmp.ne.s32.totalorder %s142, %s156
      %p158 = scmp.eq.s32.totalorder %s27, 0
      %p159 = por %p157, %p158
      %s161 = sadd.s32 %s160, 1
      %p164 = scmp.eq.s32.totalorder %s21, 3
      %p165 = scmp.ne.s32.totalorder %s160, %s162
      %p166 = scmp.eq.s32.totalorder %s21, 0
      %p167 = por %p165, %p166
      %p168 = scmp.ne.s32.totalorder %s160, %s162
      %p169 = scmp.eq.s32.totalorder %s26, 3
      %p170 = por %p168, %p169
      %p171 = scmp.ne.s32.totalorder %s162, %s163
      %p172 = scmp.eq.s32.totalorder %s26, 0
      %p173 = por %p171, %p172
      %p174 = scmp.ne.s32.totalorder %s162, %s163
      %p175 = scmp.eq.s32.totalorder %s27, 3
      %p176 = por %p174, %p175
      %p178 = scmp.ne.s32.totalorder %s163, %s177
      %p179 = scmp.eq.s32.totalorder %s27, 0
      %p180 = por %p178, %p179
      %s181 = ssub.s32 %s28, %s40
      %s182 = ssub.s32 %s29, %s36
      %s183 = sor.u32 %s181, %s182
      %p184 = scmp.eq.s32.totalorder %s183, 0
      %s186 = sadd.s32 %s185, 1
      %s187 = scalar_select %p184, %s185, %s186
      %p190 = pneg %p184
      %p191 = scmp.eq.s32.totalorder %s21, 3
      %p192 = por %p190, %p191
      %p193 = scmp.ne.s32.totalorder %s185, %s188
      %p194 = scmp.eq.s32.totalorder %s21, 0
      %p195 = por %p193, %p194
      %p196 = scmp.ne.s32.totalorder %s185, %s188
      %p197 = scmp.eq.s32.totalorder %s26, 3
      %p198 = por %p196, %p197
      %p199 = scmp.ne.s32.totalorder %s188, %s189
      %p200 = scmp.eq.s32.totalorder %s26, 0
      %p201 = por %p199, %p200
      %p202 = scmp.ne.s32.totalorder %s188, %s189
      %p203 = scmp.eq.s32.totalorder %s27, 3
      %p204 = por %p202, %p203
      %p206 = scmp.ne.s32.totalorder %s189, %s205
      %p207 = scmp.eq.s32.totalorder %s27, 0
      %p208 = por %p206, %p207
      %p209 = scmp.le.s32.totalorder 1, %s21
      %p210 = scmp.lt.s32.totalorder %s21, 5
      %p211 = pnand %p209, %p210
      %p212 = pneg %p211
      // Predicated region
      $region9: #{tpu_custom_call.1} parent=5 // pred_check
        _
      $region10: #{tpu_custom_call.1} parent=5 // pred_check_branch
        %214 = sbr.rel (%p211) target = $region12
      $region11: #{tpu_custom_call.1} parent=5 // pred_region
        %s215 = ssub.s32 %s21, 1
        // Predicated region
        $region13: #{tpu_custom_call.1} parent=11 // pred_check
          %p216 = pneg %p110
        $region14: #{tpu_custom_call.1} parent=11 // pred_check_branch
          %218 = sbr.rel (%p216) target = $region16
        $region15: #{tpu_custom_call.1} parent=11 // pred_region
          %220 = vsyncadd [#allocation6], 0
          %s221 = sshll.u32 %s2, 4
          %s222 = int_to_ptr.hbm [resolvable:$true] %s221
          %s223 = sshll.u32 [#allocation7], 4
          %s224 = int_to_ptr.vmem [resolvable:$true] %s223
          %229 = dma.hbm_to_vmem [thread:$0]  %s222, 1536, %s224, [#allocation6], 128, 128, 8
        $region16: #{tpu_custom_call.1} parent=11 // pred_fallthru
          _
        // Predicated region
        $region17: #{tpu_custom_call.1} parent=11 // pred_check
          %p230 = pneg %p131
        $region18: #{tpu_custom_call.1} parent=11 // pred_check_branch
          %232 = sbr.rel (%p230) target = $region20
        $region19: #{tpu_custom_call.1} parent=11 // pred_region
          _
        $region20: #{tpu_custom_call.1} parent=11 // pred_fallthru
          _
        // Predicated region
        $region21: #{tpu_custom_call.1} parent=11 // pred_check
          %p233 = pneg %p152
        $region22: #{tpu_custom_call.1} parent=11 // pred_check_branch
          %235 = sbr.rel (%p233) target = $region24
        $region23: #{tpu_custom_call.1} parent=11 // pred_region
          _
        $region24: #{tpu_custom_call.1} parent=11 // pred_fallthru
          _
        // Predicated region
        $region25: #{tpu_custom_call.1} parent=11 // pred_check
          %p236 = pneg %p173
        $region26: #{tpu_custom_call.1} parent=11 // pred_check_branch
          %238 = sbr.rel (%p236) target = $region28
        $region27: #{tpu_custom_call.1} parent=11 // pred_region
          _
        $region28: #{tpu_custom_call.1} parent=11 // pred_fallthru
          _
      $region12: #{tpu_custom_call.1} parent=5 // pred_fallthru
        _
      %p239 = scmp.lt.s32.totalorder %s21, 4
      // Predicated region
      $region29: #{tpu_custom_call.1} parent=5 // pred_check
        %p240 = pneg %p239
      $region30: #{tpu_custom_call.1} parent=5 // pred_check_branch
        %242 = sbr.rel (%p240) target = $region32
      $region31: #{tpu_custom_call.1} parent=5 // pred_region
        // Predicated region
        $region33: #{tpu_custom_call.1} parent=31 // pred_check
          %p243 = pneg %p55
        $region34: #{tpu_custom_call.1} parent=31 // pred_check_branch
          %245 = sbr.rel (%p243) target = $region36
        $region35: #{tpu_custom_call.1} parent=31 // pred_region
          %s246 = sand.u32 %s45, 1
          %s247 = scalar_lea.sflag [#allocation3], %s246
          %s248 = sand.u32 %s45, 1
          %s249 = smul.addr %s248, 8
          %s250 = scalar_lea.vmem [#allocation2], %s249
          %252 = vsyncadd %s247, 0
          %s253 = smul.addr %s28, 2
          %s254 = sadd.s32 %s29, %s253
          %s255 = smul.addr %s254, 8
          %s256 = scalar_lea.hbm %s0, %s255
          %s258 = sshll.u32 %s256, 4
          %s259 = int_to_ptr.hbm [resolvable:$true] %s258
          %s260 = sshll.u32 %s250, 4
          %s261 = int_to_ptr.vmem [resolvable:$true] %s260
          %263 = dma.hbm_to_vmem [thread:$0]  %s259, 128, %s261, %s247
        $region36: #{tpu_custom_call.1} parent=31 // pred_fallthru
          _
        // Predicated region
        $region37: #{tpu_custom_call.1} parent=31 // pred_check
          %p264 = pneg %p83
        $region38: #{tpu_custom_call.1} parent=31 // pred_check_branch
          %266 = sbr.rel (%p264) target = $region40
        $region39: #{tpu_custom_call.1} parent=31 // pred_region
          %s267 = sand.u32 %s21, 1
          %s268 = scalar_lea.sflag [#allocation6], %s267
          %s269 = sand.u32 %s73, 1
          %s270 = smul.addr %s269, 2
          %s271 = scalar_lea.vmem [#allocation5], %s270
          %273 = vsyncadd %s268, 0
          %s274 = smul.addr %s28, 2
          %s275 = sadd.s32 %s29, %s274
          %s276 = smul.addr %s275, 2
          %s277 = scalar_lea.hbm %s1, %s276
          %s279 = sshll.u32 %s277, 4
          %s280 = int_to_ptr.hbm [resolvable:$true] %s279
          %s281 = sshll.u32 %s271, 4
          %s282 = int_to_ptr.vmem [resolvable:$true] %s281
          %284 = dma.hbm_to_vmem [thread:$0]  %s280, 32, %s282, %s268
        $region40: #{tpu_custom_call.1} parent=31 // pred_fallthru
          _
      $region32: #{tpu_custom_call.1} parent=5 // pred_fallthru
        _
      %p285 = scmp.le.s32.totalorder 1, %s21
      %p286 = scmp.lt.s32.totalorder %s21, 5
      %p287 = pnand %p285, %p286
      %p288 = pneg %p287
      // Predicated region
      $region41: #{tpu_custom_call.1} parent=5 // pred_check
        _
      $region42: #{tpu_custom_call.1} parent=5 // pred_check_branch
        %290 = sbr.rel (%p287) target = $region44
      $region43: #{tpu_custom_call.1} parent=5 // pred_region
        %s291 = ssub.s32 %s21, 1
        %s292 = sand.u32 %s48, 1
        %s293 = scalar_lea.sflag [#allocation3], %s292
        %s294 = sand.u32 %s48, 1
        %s295 = smul.addr %s294, 8
        %s296 = scalar_lea.vmem [#allocation2], %s295
        // Predicated region
        $region45: #{tpu_custom_call.1} parent=43 // pred_check
          %p297 = pneg %p61
        $region46: #{tpu_custom_call.1} parent=43 // pred_check_branch
          %299 = sbr.rel (%p297) target = $region48
        $region47: #{tpu_custom_call.1} parent=43 // pred_region
          %301 = dma.done %s293, 128
        $region48: #{tpu_custom_call.1} parent=43 // pred_fallthru
          _
        %s302 = sand.u32 %s26, 1
        %s303 = scalar_lea.sflag [#allocation6], %s302
        %s304 = sand.u32 %s76, 1
        %s305 = smul.addr %s304, 2
        %s306 = scalar_lea.vmem [#allocation5], %s305
        // Predicated region
        $region49: #{tpu_custom_call.1} parent=43 // pred_check
          %p307 = pneg %p89
        $region50: #{tpu_custom_call.1} parent=43 // pred_check_branch
          %309 = sbr.rel (%p307) target = $region52
        $region51: #{tpu_custom_call.1} parent=43 // pred_region
          %311 = dma.done %s303, 32
        $region52: #{tpu_custom_call.1} parent=43 // pred_fallthru
          _
        // Predicated region
        $region53: #{tpu_custom_call.1} parent=43 // pred_check
          %p312 = pneg %p110
        $region54: #{tpu_custom_call.1} parent=43 // pred_check_branch
          %314 = sbr.rel (%p312) target = $region56
        $region55: #{tpu_custom_call.1} parent=43 // pred_region
          %316 = dma.done [#allocation6], 1536
        $region56: #{tpu_custom_call.1} parent=43 // pred_fallthru
          _
        %s317 = sand.u32 %s48, 1
        %s318 = scalar_lea.sflag [#allocation3], %s317
        %s319 = sand.u32 %s48, 1
        %s320 = smul.addr %s319, 8
        %s321 = scalar_lea.vmem [#allocation2], %s320
        %p322 = pneg %p61
        %p323 = pneg %p58
        %s324 = sand.u32 %s26, 1
        %s325 = scalar_lea.sflag [#allocation6], %s324
        %s326 = sand.u32 %s76, 1
        %s327 = smul.addr %s326, 2
        %s328 = scalar_lea.vmem [#allocation5], %s327
        %p329 = pneg %p89
        %p330 = pneg %p86
        %p331 = pneg %p110
        %p332 = pneg %p107
        %p333 = pneg %p131
        %p334 = pneg %p128
        %p335 = pneg %p152
        %p336 = pneg %p149
        %p337 = pneg %p173
        %p338 = pneg %p170
        %p339 = pneg %p201
        %p340 = pneg %p198
        %s341 = sand.u32 %s188, 1
        %s342 = scalar_lea.sflag [#allocation4], %s341
        %s343 = sand.u32 %s188, 1
        %s344 = smul.addr %s343, 8
        %s345 = scalar_lea.vmem [#allocation8], %s344
        %v346 = vld [vmem:[%s296] sm:$0xff]
        %v347 = vld [vmem:[%s306] sm:$0x1]
        %v348 = vld [vmem:[%s306 + $0x1] sm:$0x1]
        %v350 = vrot.slane %v346, 7
        %vm352 = vcmask 1040384
        %v353 = vsel %vm352, %v347, %v350
        %v354 = vrot.slane %v346, 1
        %v357 = vrot.slane %v348, 1
        %vm359 = vcmask 1046528
        %v360 = vsel %vm359, %v354, %v357
        %361 = vrot.lane.b32.xlu0 %v346, 32
        %v362 = vpop.permute.xlu0 %361
        %365 = vrot.lane.b32.xlu0 %v360, 64
        %v366 = vpop.permute.xlu0 %365
        %vm368 = vcmask 261120
        %v369 = vsel %vm368, %v353, %v362
        %vm370 = vcmask 523264
        %v371 = vsel %vm370, %v369, %v366
        %v372 = vld [vmem:[#allocation7] sm:$0xff]
        %v373 = vld [vmem:[#allocation7 + $0x8] sm:$0xff]
        %v374 = vld [vmem:[#allocation7 + $0x10] sm:$0xff]
        %v375 = vld [vmem:[#allocation7 + $0x18] sm:$0xff]
        %v376 = vld [vmem:[#allocation7 + $0x20] sm:$0xff]
        %v377 = vld [vmem:[#allocation7 + $0x28] sm:$0xff]
        %v378 = vld [vmem:[#allocation7 + $0x30] sm:$0xff]
        %v379 = vld [vmem:[#allocation7 + $0x38] sm:$0xff]
        %v380 = vld [vmem:[#allocation7 + $0x40] sm:$0xff]
        %v381 = vld [vmem:[#allocation7 + $0x48] sm:$0xff]
        %v382 = vld [vmem:[#allocation7 + $0x50] sm:$0xff]
        %v383 = vld [vmem:[#allocation7 + $0x58] sm:$0xff]
        %v384 = vld [vmem:[%s3] sm:$0x1]
        %v386 = vperm.slane %v384, 0
        %vm388 = vcmask 785408
        %v390 = vsel %vm388, %v371, 0
        %392 = vmatpush.msra.mxu0 0.0
        %393 = vmatpush.msra.mxu0 0.0
        %394 = vmatpush.msra.mxu0 0.0
        %395 = vmatpush.msra.mxu0 0.0
        %396 = vmatpush.msra.mxu0 %v383
        %397 = vmatpush.msra.mxu0 %v382
        %398 = vmatpush.msra.mxu0 %v381
        %399 = vmatpush.msra.mxu0 %v380
        %400 = vmatpush.msra.mxu0 %v379
        %401 = vmatpush.msra.mxu0 %v378
        %402 = vmatpush.msra.mxu0 %v377
        %403 = vmatpush.msra.mxu0 %v376
        %404 = vmatpush.msra.mxu0 %v375
        %405 = vmatpush.msra.mxu0 %v374
        %406 = vmatpush.msra.mxu0 %v373
        %407 = vmatpush.msra.mxu0 %v372
        %408 = vmatmul.f32.gmra.mxu0 %v390
        %v409 = vpop.f32.mrf.mxu0
        %v410 = vadd.f32 %v386, %v409
        %411 = vdwg.mxu0
        %v412 = vsel %vm368, %v346, 0.0
        %v413 = vmax.f32 %v410, 0.0
        %v414 = vadd.f32 %v412, %v413
        %415 = vadd.xlane.f32.xlu0 %v414
        %v416 = vpop.xlane.xlu0 %415
        %v417 = vmul.f32 %v414, %v414
        %418 = vadd.xlane.f32.xlu0 %v417
        %v419 = vpop.xlane.xlu0 %418
        %v420 = vmul.f32 %v416, 0.03125
        %v421 = vmul.f32 %v419, 0.03125
        %v422 = vmul.f32 %v420, %v420
        %v423 = vsub.f32 %v421, %v422
        %v424 = vmax.f32 %v423, 0.0
        %v425 = vsub.f32 %v414, %v420
        %v426 = vadd.f32 %v424, 1e-05
        %v427 = vrsqrt.pop %v426
        %v428 = vmul.f32 %v427, %v426
        %v429 = vmul.f32 %v428, %v427
        %v430 = vmul.f32 0.5, %v429
        %v431 = vsub.f32 1.5, %v430
        %v432 = vmul.f32 %v427, %v431
        %vm433 = vweird.f32 %v426
        %vm434 = vweird.f32 %v427
        %vm435 = vmor %vm433, %vm434
        %v436 = vsel %vm435, %v427, %v432
        %v437 = vmul.f32 %v425, %v436
        %v438 = vld [vmem:[%s4] sm:$0x1]
        %v440 = vperm.slane %v438, 0
        %v442 = vmul.f32 %v437, %v440
        %v443 = vld [vmem:[%s5] sm:$0x1]
        %v445 = vperm.slane %v443, 0
        %v447 = vadd.f32 %v442, %v445
        %448 = vst [vmem:[%s345] sm:$0xff] %v447
        %s449 = sand.u32 %s188, 1
        %s450 = scalar_lea.sflag [#allocation4], %s449
        %s451 = sand.u32 %s188, 1
        %s452 = smul.addr %s451, 8
        %s453 = scalar_lea.vmem [#allocation8], %s452
        // Predicated region
        $region57: #{tpu_custom_call.1} parent=43 // pred_check
          %p454 = pneg %p198
        $region58: #{tpu_custom_call.1} parent=43 // pred_check_branch
          %456 = sbr.rel (%p454) target = $region60
        $region59: #{tpu_custom_call.1} parent=43 // pred_region
          %458 = vsyncadd %s450, 0
          %s459 = smul.addr %s30, 2
          %s460 = sadd.s32 %s31, %s459
          %s461 = smul.addr %s460, 8
          %s462 = scalar_lea.hbm %s6, %s461
          %s464 = sshll.u32 %s453, 4
          %s465 = int_to_ptr.vmem [resolvable:$true] %s464
          %s466 = sshll.u32 %s462, 4
          %s467 = int_to_ptr.hbm [resolvable:$true] %s466
          %469 = dma.vmem_to_hbm [thread:$0]  %s465, 128, %s467, %s450
        $region60: #{tpu_custom_call.1} parent=43 // pred_fallthru
          _
      $region44: #{tpu_custom_call.1} parent=5 // pred_fallthru
        _
      %p470 = scmp.le.s32.totalorder 2, %s21
      // Predicated region
      $region61: #{tpu_custom_call.1} parent=5 // pred_check
        %p471 = pneg %p470
      $region62: #{tpu_custom_call.1} parent=5 // pred_check_branch
        %473 = sbr.rel (%p471) target = $region64
      $region63: #{tpu_custom_call.1} parent=5 // pred_region
        %s474 = ssub.s32 %s21, 2
        // Predicated region
        $region65: #{tpu_custom_call.1} parent=63 // pred_check
          %p475 = pneg %p204
        $region66: #{tpu_custom_call.1} parent=63 // pred_check_branch
          %477 = sbr.rel (%p475) target = $region68
        $region67: #{tpu_custom_call.1} parent=63 // pred_region
          %s478 = sand.u32 %s189, 1
          %s479 = scalar_lea.sflag [#allocation4], %s478
          %s480 = sand.u32 %s189, 1
          %s481 = smul.addr %s480, 8
          %s482 = scalar_lea.vmem [#allocation8], %s481
          %484 = dma.done %s479, 128
        $region68: #{tpu_custom_call.1} parent=63 // pred_fallthru
          _
      $region64: #{tpu_custom_call.1} parent=5 // pred_fallthru
        _
    $region6: #{tpu_custom_call.1} parent=1 // loop_footer
      %s25 = sadd.s32 1, %s21
    $region7: #{tpu_custom_call.1} parent=1 // loop_footer_branch
      %20 = sbr.rel target = $region3
    $region8: #{tpu_custom_call.1} parent=1 // loop_exit
      _
    %485 = vsyncpa [#allocation3], 1
    %s486 = scalar_lea.sflag [#allocation3], 1
    %487 = vsyncpa %s486, 1
    %488 = vsyncpa [#allocation6], 1
    %s489 = scalar_lea.sflag [#allocation6], 1
    %490 = vsyncpa %s489, 1
    %491 = vsyncpa [#allocation4], 1
    %s492 = scalar_lea.sflag [#allocation4], 1
    %493 = vsyncpa %s492, 1

</llo_original>
